<compile_context>
chip_gen: v5e
topology: v5e:2x2
jax: 0.10.0
libtpu: 0.0.40
codegen_flags: <defaults>
</compile_context>

<pallas_src>
import functools

import numpy as np
import jax
import jax.numpy as jnp
from jax.experimental import pallas as pl
from jax.experimental.pallas import tpu as pltpu


# ----------------------------------------------------------------------------
# Host-side constant construction (matches BicubicUpsampler.__init__ exactly).
# ----------------------------------------------------------------------------
def _make_cubic_kernels(scale_factor: int, a: float = -0.75) -> np.ndarray:
    cubic = np.array(
        [
            [0.0, a, -2.0 * a, a],
            [1.0, 0.0, -(a + 3.0), a + 2.0],
            [0.0, -a, 2.0 * a + 3.0, -(a + 2.0)],
            [0.0, 0.0, a, -a],
        ],
        dtype=np.float32,
    )
    rows = []
    for d in range(scale_factor):
        s = 1.0 * d / scale_factor
        rows.append(cubic @ np.array([1.0, s, s * s, s * s * s], dtype=np.float32))
    return np.stack(rows).astype(np.float32)  # (f, 4)


def _make_interp_matrix(kernels: np.ndarray, size: int, f: int) -> np.ndarray:
    """M of shape (f*size, size+3): M[i*f+d, i+k] = kernels[d, k] (acts on padded axis)."""
    out_size = f * size
    rows = np.arange(out_size)
    i = rows // f  # source index
    d = rows % f   # sub-pixel phase
    cols = np.arange(size + 3)
    k = cols[None, :] - i[:, None]
    valid = (k >= 0) & (k < 4)
    kvals = kernels[d[:, None], np.clip(k, 0, 3)]
    return np.where(valid, kvals, 0.0).astype(np.float32)


def _fold_replicate_pad(m: np.ndarray, size: int) -> np.ndarray:
    """Fold the (left=1, right=2) replicate pad into M -> (f*size, size)."""
    p = np.arange(size + 3)
    src = np.clip(p - 1, 0, size - 1)  # padded index -> source index (replicate)
    pad_mat = np.zeros((size + 3, size), dtype=np.float32)
    pad_mat[p, src] = 1.0
    return (m @ pad_mat).astype(np.float32)


# ----------------------------------------------------------------------------
# Chip-aware parameters.
# ----------------------------------------------------------------------------
def _tpu_generation_info():
    """(mxu_contraction, num_tensorcores, vmem_budget_bytes); conservative fallback."""
    mxu_k, cores, budget = 128, 1, 32 * 2**20
    try:
        kind = jax.devices()[0].device_kind.lower()
        if ("v5 lite" in kind) or ("v5e" in kind) or ("v5litepod" in kind):
            mxu_k, cores, budget = 128, 1, 96 * 2**20   # 4x128^2 MXU, 128 MiB VMEM
        elif "v6" in kind:
            mxu_k, cores, budget = 256, 1, 96 * 2**20   # 2x256^2 MXU, 128 MiB VMEM
        elif "v7" in kind:
            mxu_k, cores, budget = 256, 2, 40 * 2**20   # 2 TCs, 64 MiB VMEM/TC
    except Exception:
        pass
    return mxu_k, cores, budget


def _pick_blocking(nc, h, w, f, compute_itemsize, out_itemsize,
                   mxu_k, num_cores, vmem_budget):
    """Pick (bc, sb): channel slabs per grid step and slabs per horizontal sub-dot."""
    divisors = [d for d in range(1, nc + 1) if nc % d == 0]
    sb_cap = max(1, mxu_k // max(w, 1))   # keep K = sb*w within one MXU pass

    def sub_block(bc):
        return max(d for d in range(1, bc + 1) if bc % d == 0 and d <= sb_cap)

    def vmem_bytes(bc):
        sb = sub_block(bc)
        x_blk = 2 * h * bc * w * compute_itemsize            # double-buffered input
        a_mat = (f * h) * h * compute_itemsize               # constant (single-buffered)
        bt_mat = (sb * w) * (sb * f * w) * compute_itemsize  # constant (single-buffered)
        out_blk = 2 * bc * (f * h) * (f * w) * out_itemsize  # double-buffered OUTPUT dtype
        tmp = (f * h) * (bc * w) * 4                         # f32 vertical-pass intermediate
        return x_blk + a_mat + bt_mat + out_blk + tmp

    fit = [d for d in divisors if vmem_bytes(d) <= vmem_budget] or [1]
    if num_cores > 1:
        # v7x: keep the grid length a (nonzero) multiple of the core count.
        balanced = [d for d in fit
                    if (nc // d) >= num_cores and (nc // d) % num_cores == 0]
        fit = balanced or fit
    bc = max(fit)   # single-TC chips: fewest grid steps
    return bc, sub_block(bc)


def _const_spec(block_shape, index_map, single_buffer):
    """BlockSpec for a grid-invariant operand; single-buffer it when it pays."""
    if single_buffer:
        try:
            return pl.BlockSpec(block_shape, index_map, pipeline_mode=pl.Buffered(1))
        except Exception:
            pass
    return pl.BlockSpec(block_shape, index_map)


# ----------------------------------------------------------------------------
# Kernels.
# ----------------------------------------------------------------------------
def _bicubic_kernel_packed(a_ref, x_ref, bt_ref, o_ref, *, bc, sb, w, f):
    # a_ref : (f*H, H)          vertical interpolation matrix (pad folded in)
    # x_ref : (1, H, BC*W)      BC channel slabs lane-stacked
    # bt_ref: (SB*W, SB*f*W)    block-diagonal B_eff^T over SB slabs only
    # o_ref : (1, f*H, BC*f*W)  BC output slabs lane-stacked
    tmp = jnp.dot(a_ref[...], x_ref[0], preferred_element_type=jnp.float32)
    fw = f * w
    for b in range(bc // sb):
        chunk = tmp[:, b * sb * w:(b + 1) * sb * w].astype(bt_ref.dtype)
        part = jnp.dot(chunk, bt_ref[...], preferred_element_type=jnp.float32)
        o_ref[0, :, b * sb * fw:(b + 1) * sb * fw] = part.astype(o_ref.dtype)


def _bicubic_kernel_deinterleaved(a_ref, x_ref, bt_ref, o_ref, *, bc, sb, w, f):
    # Same as above but stores each slab directly into NCHW layout
    # (used only when f*W is a multiple of 128 -> lane-dense full-row stores).
    tmp = jnp.dot(a_ref[...], x_ref[0], preferred_element_type=jnp.float32)
    fw = f * w
    for b in range(bc // sb):
        chunk = tmp[:, b * sb * w:(b + 1) * sb * w].astype(bt_ref.dtype)
        part = jnp.dot(chunk, bt_ref[...], preferred_element_type=jnp.float32)
        for s in range(sb):
            o_ref[b * sb + s] = part[:, s * fw:(s + 1) * fw].astype(o_ref.dtype)


# ----------------------------------------------------------------------------
# Wrapper.
# ----------------------------------------------------------------------------
def bicubic_upsample(x: jnp.ndarray, scale_factor: int = 4, a: float = -0.75,
                     compute_dtype=jnp.float32) -> jnp.ndarray:
    n, c, h, w = x.shape
    f = int(scale_factor)
    nc = n * c
    out_dtype = x.dtype

    kern = _make_cubic_kernels(f, a)                                   # (f, 4)
    a_eff = _fold_replicate_pad(_make_interp_matrix(kern, h, f), h)    # (f*h, h)
    b_eff = _fold_replicate_pad(_make_interp_matrix(kern, w, f), w)    # (f*w, w)

    compute_itemsize = jnp.dtype(compute_dtype).itemsize
    out_itemsize = jnp.dtype(out_dtype).itemsize
    mxu_k, num_cores, vmem_budget = _tpu_generation_info()
    bc, sb = _pick_blocking(nc, h, w, f, compute_itemsize, out_itemsize,
                            mxu_k, num_cores, vmem_budget)
    g = nc // bc

    # Block-diagonal B_eff^T over only SB slabs (K = sb*w <= one MXU pass).
    bt = b_eff.T                                                       # (w, f*w)
    bt_small = np.zeros((sb * w, sb * f * w), dtype=np.float32)
    for s in range(sb):
        bt_small[s * w:(s + 1) * w, s * f * w:(s + 1) * f * w] = bt

    a_dev = jnp.asarray(a_eff, dtype=compute_dtype)
    bt_dev = jnp.asarray(bt_small, dtype=compute_dtype)

    # Lane-stack bc slabs per group: (nc, h, w) -> (g, h, bc*w). Cheap — only
    # touches the un-inflated input.
    x_g = (x.astype(compute_dtype)
           .reshape(g, bc, h, w)
           .transpose(0, 2, 1, 3)
           .reshape(g, h, bc * w))

    single_buffer_consts = (a_dev.size + bt_dev.size) * compute_itemsize > (2 << 20)

    cost = pl.CostEstimate(
        flops=2 * nc * (f * h) * h * w
        + 2 * (nc // sb) * (f * h) * (sb * w) * (sb * f * w),
        transcendentals=0,
        bytes_accessed=(x_g.size * compute_itemsize
                        + a_dev.size * compute_itemsize
                        + bt_dev.size * compute_itemsize
                        + nc * (f * h) * (f * w) * out_itemsize),
    )
    cparams = pltpu.CompilerParams(
        dimension_semantics=("parallel",),
        vmem_limit_bytes=int(vmem_budget),
    )
    in_specs = [
        _const_spec((f * h, h), lambda b: (0, 0), single_buffer_consts),
        pl.BlockSpec((1, h, bc * w), lambda b: (b, 0, 0)),
        _const_spec((sb * w, sb * f * w), lambda b: (0, 0), single_buffer_consts),
    ]

    if (f * w) % 128 == 0:
        # Real-frame path: de-interleave inside the kernel with lane-dense
        # per-slab stores; the wrapper reshape below is metadata-only.
        kernel = functools.partial(_bicubic_kernel_deinterleaved,
                                   bc=bc, sb=sb, w=w, f=f)
        out_flat = pl.pallas_call(
            kernel,
            out_shape=jax.ShapeDtypeStruct((nc, f * h, f * w), out_dtype),
            grid=(g,),
            in_specs=in_specs,
            out_specs=pl.BlockSpec((bc, f * h, f * w), lambda b: (b, 0, 0)),
            compiler_params=cparams,
            cost_estimate=cost,
        )(a_dev, x_g, bt_dev)
        return out_flat.reshape(n, c, f * h, f * w)

    # Small-frame path (f*w not lane-aligned, e.g. the 16x16 test): keep the
    # lane-packed output block; de-interleave in the wrapper.
    kernel = functools.partial(_bicubic_kernel_packed, bc=bc, sb=sb, w=w, f=f)
    out_g = pl.pallas_call(
        kernel,
        out_shape=jax.ShapeDtypeStruct((g, f * h, bc * f * w), out_dtype),
        grid=(g,),
        in_specs=in_specs,
        out_specs=pl.BlockSpec((1, f * h, bc * f * w), lambda b: (b, 0, 0)),
        compiler_params=cparams,
        cost_estimate=cost,
    )(a_dev, x_g, bt_dev)
    out = (out_g.reshape(g, f * h, bc, f * w)
           .transpose(0, 2, 1, 3)
           .reshape(n, c, f * h, f * w))
    return out


# ----------------------------------------------------------------------------
# Pure-JAX reference matching the PyTorch forward tap-by-tap (incl. edge pad).
# ----------------------------------------------------------------------------
def reference_bicubic(x: jnp.ndarray, scale_factor: int = 4, a: float = -0.75) -> jnp.ndarray:
    n, c, h, w = x.shape
    f = scale_factor
    kernels = jnp.asarray(_make_cubic_kernels(f, a))  # (f, 4)
    xp = jnp.pad(
        x.reshape(n * c, h, w).astype(jnp.float32),
        ((0, 0), (1, 2), (1, 2)),
        mode="edge",
    )
    v = sum(
        kernels[None, :, k, None, None] * xp[:, None, k: k + h, :] for k in range(4)
    )
    v = v.transpose(0, 2, 1, 3).reshape(n * c, f * h, w + 3)
    hh = sum(
        kernels[None, None, :, k, None] * v[:, :, None, k: k + w] for k in range(4)
    )
    hh = hh.transpose(0, 1, 3, 2).reshape(n * c, f * h, f * w)
    return hh.reshape(n, c, f * h, f * w).astype(x.dtype)


if __name__ == "__main__":
    key = jax.random.PRNGKey(0)
    n, c, h, w = 2, 4, 16, 16
    scale = 4
    x = jax.random.normal(key, (n, c, h, w), dtype=jnp.float32)

    out = jax.block_until_ready(bicubic_upsample(x, scale_factor=scale))
    ref = jax.block_until_ready(reference_bicubic(x, scale_factor=scale))

    assert out.shape == (n, c, scale * h, scale * w), out.shape
    np.testing.assert_allclose(np.asarray(out), np.asarray(ref), rtol=1e-5, atol=1e-5)

    print("KERNEL_OK")
</pallas_src>

<mosaic_0001>
module attributes {stable_mosaic.version = 11 : i64} {
  func.func @_bicubic_kernel_packed(%arg0: i32, %arg1: memref<64x16xf32, #tpu.memory_space<vmem>>, %arg2: memref<1x16x128xf32, #tpu.memory_space<vmem>>, %arg3: memref<128x512xf32, #tpu.memory_space<vmem>>, %arg4: memref<1x64x512xf32, #tpu.memory_space<vmem>>) attributes {dimension_semantics = [#tpu.dimension_semantics<parallel>], iteration_bounds = array<i64: 1>, scalar_prefetch = 0 : i64, scratch_operands = 0 : i64, tpu.core_type = #tpu.core_type<tc>, window_params = [{pipeline_mode = #tpu.pipeline_mode<synchronous>, transform_indices = @transform_0, window_bounds = array<i64: 64, 16>}, {transform_indices = @transform_1, window_bounds = array<i64: 1, 16, 128>}, {pipeline_mode = #tpu.pipeline_mode<synchronous>, transform_indices = @transform_2, window_bounds = array<i64: 128, 512>}, {transform_indices = @transform_3, window_bounds = array<i64: 1, 64, 512>}]} {
    %c0 = arith.constant 0 : index
    %c0_0 = arith.constant 0 : index
    %0 = vector.load %arg1[%c0, %c0_0] : memref<64x16xf32, #tpu.memory_space<vmem>>, vector<64x16xf32>
    %c0_1 = arith.constant 0 : index
    %c0_2 = arith.constant 0 : index
    %c0_3 = arith.constant 0 : index
    %1 = vector.load %arg2[%c0_1, %c0_2, %c0_3] : memref<1x16x128xf32, #tpu.memory_space<vmem>>, vector<1x16x128xf32>
    %2 = vector.shape_cast %1 : vector<1x16x128xf32> to vector<16x128xf32>
    %cst = arith.constant dense<0.000000e+00> : vector<64x128xf32>
    %3 = tpu.matmul %0, %2, %cst {dimension_numbers = #tpu.dot_dimension_numbers<[1], [0], [0], [1], [0, 0, 1, 1], [], []>} : vector<64x16xf32>, vector<16x128xf32>, vector<64x128xf32> -> vector<64x128xf32>
    %c0_4 = arith.constant 0 : index
    %c0_5 = arith.constant 0 : index
    %4 = vector.load %arg3[%c0_4, %c0_5] : memref<128x512xf32, #tpu.memory_space<vmem>>, vector<128x512xf32>
    %cst_6 = arith.constant dense<0.000000e+00> : vector<64x512xf32>
    %5 = tpu.matmul %3, %4, %cst_6 {dimension_numbers = #tpu.dot_dimension_numbers<[1], [0], [0], [1], [0, 0, 1, 1], [], []>} : vector<64x128xf32>, vector<128x512xf32>, vector<64x512xf32> -> vector<64x512xf32>
    %c0_7 = arith.constant 0 : index
    %c0_8 = arith.constant 0 : index
    %c0_9 = arith.constant 0 : index
    %6 = vector.load %arg4[%c0_7, %c0_8, %c0_9] : memref<1x64x512xf32, #tpu.memory_space<vmem>>, vector<1x64x512xf32>
    %7 = vector.shape_cast %6 : vector<1x64x512xf32> to vector<64x512xf32>
    %8 = vector.shape_cast %5 : vector<64x512xf32> to vector<1x64x512xf32>
    tpu.vector_store %arg4[%c0_7, %c0_8, %c0_9], %8 {strides = array<i32>} : memref<1x64x512xf32, #tpu.memory_space<vmem>>, vector<1x64x512xf32>,
    return
  }
  func.func @transform_0(%arg0: i32) -> (i32, i32) {
    %c0_i32 = arith.constant 0 : i32
    %c0_i32_0 = arith.constant 0 : i32
    %c0_i32_1 = arith.constant 0 : i32
    return %c0_i32, %c0_i32_0 : i32, i32
  }
  func.func @transform_1(%arg0: i32) -> (i32, i32, i32) {
    %c0_i32 = arith.constant 0 : i32
    %c0_i32_0 = arith.constant 0 : i32
    %c0_i32_1 = arith.constant 0 : i32
    return %arg0, %c0_i32, %c0_i32_0 : i32, i32, i32
  }
  func.func @transform_2(%arg0: i32) -> (i32, i32) {
    %c0_i32 = arith.constant 0 : i32
    %c0_i32_0 = arith.constant 0 : i32
    %c0_i32_1 = arith.constant 0 : i32
    return %c0_i32, %c0_i32_0 : i32, i32
  }
  func.func @transform_3(%arg0: i32) -> (i32, i32, i32) {
    %c0_i32 = arith.constant 0 : i32
    %c0_i32_0 = arith.constant 0 : i32
    %c0_i32_1 = arith.constant 0 : i32
    return %arg0, %c0_i32, %c0_i32_0 : i32, i32, i32
  }
}

</mosaic_0001>

<llo_original>
// kernel: tpu_custom_call.1
$region0: #{tpu_custom_call.1}
  #allocation0 [shape = 'u32[]', space=smem, size = 0x4, offset = 0x4, fixed_abs, tag = 'smem constant byte address 0x4 - core index']
  #allocation1 [shape = 'u32[72,128]{1,0:T(1,128)}', space=vmem, size = 0x9000, scoped, tag = 'internal scratch']
  %s0 = inlined_call_operand.vmem [shape: f32[64,16], index: 0, kind: input, shape index: {}]
  %s1 = inlined_call_operand.vmem [shape: f32[1,16,128], index: 1, kind: input, shape index: {}]
  %s2 = inlined_call_operand.hbm [shape: f32[128,512], index: 2, kind: input, shape index: {}]
  %s3 = inlined_call_operand.hbm [shape: f32[1,64,512], index: 3, kind: output, shape index: {}]
  %s4 = sld [smem:[#allocation0]]
  $region26: #{tpu_custom_call.1} parent=0
    _
  %s6 = ssub.s32 1, %s4
  %s7 = scalar_select 0, %s6, %s4
  $region1: #{tpu_custom_call.1} parent=0
    #allocation2 [shape = 'u8[262144]{0}', space=vmem, size = 0x40000, scoped, tag = 'input window, operand 2, single buffered']
    #allocation3 [shape = 's32[1]{0}', space=sflag, size = 0x4, scoped, tag = 'scoped memory for tpu_custom_call.1']
    #allocation4 [shape = 's32[1]{0}', space=sflag, size = 0x4, scoped, tag = 'scoped memory for tpu_custom_call.1']
    #allocation5 [shape = 'u8[131072]{0}', space=vmem, size = 0x20000, scoped, tag = 'output window, operand 0, single buffered']
    %8 = vsyncpa [#allocation3], 0
    %9 = vsyncpa [#allocation4], 0
    // Predicated region
    $region2: #{tpu_custom_call.1} parent=1 // pred_check
      _
    $region3: #{tpu_custom_call.1} parent=1 // pred_check_branch
      %11 = sbr.rel (0) target = $region5
    $region4: #{tpu_custom_call.1} parent=1 // pred_region
      _
    $region5: #{tpu_custom_call.1} parent=1 // pred_fallthru
      _
    // Predicated region
    $region6: #{tpu_custom_call.1} parent=1 // pred_check
      _
    $region7: #{tpu_custom_call.1} parent=1 // pred_check_branch
      %13 = sbr.rel (0) target = $region9
    $region8: #{tpu_custom_call.1} parent=1 // pred_region
      _
    $region9: #{tpu_custom_call.1} parent=1 // pred_fallthru
      _
    // Predicated region
    $region10: #{tpu_custom_call.1} parent=1 // pred_check
      _
    $region11: #{tpu_custom_call.1} parent=1 // pred_check_branch
      %15 = sbr.rel (0) target = $region13
    $region12: #{tpu_custom_call.1} parent=1 // pred_region
      %17 = vsyncadd [#allocation3], 0
      %s18 = sshll.u32 %s2, 4
      %s19 = int_to_ptr.hbm [resolvable:$true] %s18
      %s20 = sshll.u32 [#allocation2], 4
      %s21 = int_to_ptr.vmem [resolvable:$true] %s20
      %26 = dma.hbm_to_vmem [thread:$0]  %s19, 8192, %s21, [#allocation3], 512, 512, 32
    $region13: #{tpu_custom_call.1} parent=1 // pred_fallthru
      _
    // Predicated region
    $region14: #{tpu_custom_call.1} parent=1 // pred_check
      _
    $region15: #{tpu_custom_call.1} parent=1 // pred_check_branch
      %28 = sbr.rel (0) target = $region17
    $region16: #{tpu_custom_call.1} parent=1 // pred_region
      %30 = dma.done [#allocation3], 8192
    $region17: #{tpu_custom_call.1} parent=1 // pred_fallthru
      _
    %v31 = vld [vmem:[%s0] sm:$0xff]
    %v32 = vld [vmem:[%s0 + $0x8] sm:$0xff]
    %v33 = vld [vmem:[%s0 + $0x10] sm:$0xff]
    %v34 = vld [vmem:[%s0 + $0x18] sm:$0xff]
    %v35 = vld [vmem:[%s0 + $0x20] sm:$0xff]
    %v36 = vld [vmem:[%s0 + $0x28] sm:$0xff]
    %v37 = vld [vmem:[%s0 + $0x30] sm:$0xff]
    %v38 = vld [vmem:[%s0 + $0x38] sm:$0xff]
    %v39 = vld [vmem:[%s1] sm:$0xff]
    %v40 = vld [vmem:[%s1 + $0x8] sm:$0xff]
    %vm41 = vcmask 130048
    %v43 = vsel %vm41, %v31, 0
    %v46 = vsel %vm41, %v32, 0
    %v49 = vsel %vm41, %v33, 0
    %v52 = vsel %vm41, %v34, 0
    %v55 = vsel %vm41, %v35, 0
    %v58 = vsel %vm41, %v36, 0
    %v61 = vsel %vm41, %v37, 0
    %v64 = vsel %vm41, %v38, 0
    %66 = vmatpush.msra.mxu0 0.0
    %67 = vmatpush.msra.mxu0 0.0
    %68 = vmatpush.msra.mxu0 0.0
    %69 = vmatpush.msra.mxu0 0.0
    %70 = vmatpush.msra.mxu0 0.0
    %71 = vmatpush.msra.mxu0 0.0
    %72 = vmatpush.msra.mxu0 0.0
    %73 = vmatpush.msra.mxu0 0.0
    %74 = vmatpush.msra.mxu0 0.0
    %75 = vmatpush.msra.mxu0 0.0
    %76 = vmatpush.msra.mxu0 0.0
    %77 = vmatpush.msra.mxu0 0.0
    %78 = vmatpush.msra.mxu0 0.0
    %79 = vmatpush.msra.mxu0 0.0
    %80 = vmatpush.msra.mxu0 %v40
    %81 = vmatpush.msra.mxu0 %v39
    %82 = vmatmul.f32.gmra.mxu0 %v43
    %v83 = vpop.f32.mrf.mxu0
    %v84 = vadd.f32 0.0, %v83
    %85 = vmatmul.f32.gmra.mxu0 %v46
    %v86 = vpop.f32.mrf.mxu0
    %v87 = vadd.f32 0.0, %v86
    %88 = vmatmul.f32.gmra.mxu0 %v49
    %v89 = vpop.f32.mrf.mxu0
    %v90 = vadd.f32 0.0, %v89
    %91 = vmatmul.f32.gmra.mxu0 %v52
    %v92 = vpop.f32.mrf.mxu0
    %v93 = vadd.f32 0.0, %v92
    %94 = vmatmul.f32.gmra.mxu0 %v55
    %v95 = vpop.f32.mrf.mxu0
    %v96 = vadd.f32 0.0, %v95
    %97 = vmatmul.f32.gmra.mxu0 %v58
    %v98 = vpop.f32.mrf.mxu0
    %v99 = vadd.f32 0.0, %v98
    %100 = vmatmul.f32.gmra.mxu0 %v61
    %v101 = vpop.f32.mrf.mxu0
    %v102 = vadd.f32 0.0, %v101
    %103 = vmatmul.f32.gmra.mxu0 %v64
    %v104 = vpop.f32.mrf.mxu0
    %v105 = vadd.f32 0.0, %v104
    %106 = vdwg.mxu0
    %v107 = vld [vmem:[#allocation2] sm:$0xff]
    %v108 = vld [vmem:[#allocation2 + $0x8] sm:$0xff]
    %v109 = vld [vmem:[#allocation2 + $0x10] sm:$0xff]
    %v110 = vld [vmem:[#allocation2 + $0x18] sm:$0xff]
    %v111 = vld [vmem:[#allocation2 + $0x20] sm:$0xff]
    %v112 = vld [vmem:[#allocation2 + $0x28] sm:$0xff]
    %v113 = vld [vmem:[#allocation2 + $0x30] sm:$0xff]
    %v114 = vld [vmem:[#allocation2 + $0x38] sm:$0xff]
    %v115 = vld [vmem:[#allocation2 + $0x40] sm:$0xff]
    %v116 = vld [vmem:[#allocation2 + $0x48] sm:$0xff]
    %v117 = vld [vmem:[#allocation2 + $0x50] sm:$0xff]
    %v118 = vld [vmem:[#allocation2 + $0x58] sm:$0xff]
    %v119 = vld [vmem:[#allocation2 + $0x60] sm:$0xff]
    %v120 = vld [vmem:[#allocation2 + $0x68] sm:$0xff]
    %v121 = vld [vmem:[#allocation2 + $0x70] sm:$0xff]
    %v122 = vld [vmem:[#allocation2 + $0x78] sm:$0xff]
    %v123 = vld [vmem:[#allocation2 + $0x80] sm:$0xff]
    %v124 = vld [vmem:[#allocation2 + $0x88] sm:$0xff]
    %v125 = vld [vmem:[#allocation2 + $0x90] sm:$0xff]
    %v126 = vld [vmem:[#allocation2 + $0x98] sm:$0xff]
    %v127 = vld [vmem:[#allocation2 + $0xa0] sm:$0xff]
    %v128 = vld [vmem:[#allocation2 + $0xa8] sm:$0xff]
    %v129 = vld [vmem:[#allocation2 + $0xb0] sm:$0xff]
    %v130 = vld [vmem:[#allocation2 + $0xb8] sm:$0xff]
    %v131 = vld [vmem:[#allocation2 + $0xc0] sm:$0xff]
    %v132 = vld [vmem:[#allocation2 + $0xc8] sm:$0xff]
    %v133 = vld [vmem:[#allocation2 + $0xd0] sm:$0xff]
    %v134 = vld [vmem:[#allocation2 + $0xd8] sm:$0xff]
    %v135 = vld [vmem:[#allocation2 + $0xe0] sm:$0xff]
    %v136 = vld [vmem:[#allocation2 + $0xe8] sm:$0xff]
    %v137 = vld [vmem:[#allocation2 + $0xf0] sm:$0xff]
    %v138 = vld [vmem:[#allocation2 + $0xf8] sm:$0xff]
    %v139 = vld [vmem:[#allocation2 + $0x100] sm:$0xff]
    %v140 = vld [vmem:[#allocation2 + $0x108] sm:$0xff]
    %v141 = vld [vmem:[#allocation2 + $0x110] sm:$0xff]
    %v142 = vld [vmem:[#allocation2 + $0x118] sm:$0xff]
    %v143 = vld [vmem:[#allocation2 + $0x120] sm:$0xff]
    %v144 = vld [vmem:[#allocation2 + $0x128] sm:$0xff]
    %v145 = vld [vmem:[#allocation2 + $0x130] sm:$0xff]
    %v146 = vld [vmem:[#allocation2 + $0x138] sm:$0xff]
    %v147 = vld [vmem:[#allocation2 + $0x140] sm:$0xff]
    %v148 = vld [vmem:[#allocation2 + $0x148] sm:$0xff]
    %v149 = vld [vmem:[#allocation2 + $0x150] sm:$0xff]
    %v150 = vld [vmem:[#allocation2 + $0x158] sm:$0xff]
    %v151 = vld [vmem:[#allocation2 + $0x160] sm:$0xff]
    %v152 = vld [vmem:[#allocation2 + $0x168] sm:$0xff]
    %v153 = vld [vmem:[#allocation2 + $0x170] sm:$0xff]
    %v154 = vld [vmem:[#allocation2 + $0x178] sm:$0xff]
    %v155 = vld [vmem:[#allocation2 + $0x180] sm:$0xff]
    %v156 = vld [vmem:[#allocation2 + $0x188] sm:$0xff]
    %v157 = vld [vmem:[#allocation2 + $0x190] sm:$0xff]
    %v158 = vld [vmem:[#allocation2 + $0x198] sm:$0xff]
    %v159 = vld [vmem:[#allocation2 + $0x1a0] sm:$0xff]
    %v160 = vld [vmem:[#allocation2 + $0x1a8] sm:$0xff]
    %v161 = vld [vmem:[#allocation2 + $0x1b0] sm:$0xff]
    %v162 = vld [vmem:[#allocation2 + $0x1b8] sm:$0xff]
    %v163 = vld [vmem:[#allocation2 + $0x1c0] sm:$0xff]
    %v164 = vld [vmem:[#allocation2 + $0x1c8] sm:$0xff]
    %v165 = vld [vmem:[#allocation2 + $0x1d0] sm:$0xff]
    %v166 = vld [vmem:[#allocation2 + $0x1d8] sm:$0xff]
    %v167 = vld [vmem:[#allocation2 + $0x1e0] sm:$0xff]
    %v168 = vld [vmem:[#allocation2 + $0x1e8] sm:$0xff]
    %v169 = vld [vmem:[#allocation2 + $0x1f0] sm:$0xff]
    %v170 = vld [vmem:[#allocation2 + $0x1f8] sm:$0xff]
    %171 = vmatpush.msra.mxu0 %v167
    %172 = vmatpush.msra.mxu0 %v163
    %173 = vmatpush.msra.mxu0 %v159
    %174 = vmatpush.msra.mxu0 %v155
    %175 = vmatpush.msra.mxu0 %v151
    %176 = vmatpush.msra.mxu0 %v147
    %177 = vmatpush.msra.mxu0 %v143
    %178 = vmatpush.msra.mxu0 %v139
    %179 = vmatpush.msra.mxu0 %v135
    %180 = vmatpush.msra.mxu0 %v131
    %181 = vmatpush.msra.mxu0 %v127
    %182 = vmatpush.msra.mxu0 %v123
    %183 = vmatpush.msra.mxu0 %v119
    %184 = vmatpush.msra.mxu0 %v115
    %185 = vmatpush.msra.mxu0 %v111
    %186 = vmatpush.msra.mxu0 %v107
    %187 = vmatmul.f32.gmra.mxu0 %v84
    %v188 = vpop.f32.mrf.mxu0
    %v189 = vadd.f32 0.0, %v188
    %190 = vmatmul.f32.gmra.mxu0 %v87
    %v191 = vpop.f32.mrf.mxu0
    %v192 = vadd.f32 0.0, %v191
    %193 = vmatmul.f32.gmra.mxu0 %v90
    %v194 = vpop.f32.mrf.mxu0
    %v195 = vadd.f32 0.0, %v194
    %196 = vmatmul.f32.gmra.mxu0 %v93
    %v197 = vpop.f32.mrf.mxu0
    %v198 = vadd.f32 0.0, %v197
    %199 = vmatmul.f32.gmra.mxu0 %v96
    %v200 = vpop.f32.mrf.mxu0
    %v201 = vadd.f32 0.0, %v200
    %202 = vmatmul.f32.gmra.mxu0 %v99
    %v203 = vpop.f32.mrf.mxu0
    %v204 = vadd.f32 0.0, %v203
    %205 = vmatmul.f32.gmra.mxu0 %v102
    %v206 = vpop.f32.mrf.mxu0
    %v207 = vadd.f32 0.0, %v206
    %208 = vmatmul.f32.gmra.mxu0 %v105
    %v209 = vpop.f32.mrf.mxu0
    %v210 = vadd.f32 0.0, %v209
    %211 = vdwg.mxu0
    %212 = vmatpush.msra.mxu0 %v168
    %213 = vmatpush.msra.mxu0 %v164
    %214 = vmatpush.msra.mxu0 %v160
    %215 = vmatpush.msra.mxu0 %v156
    %216 = vmatpush.msra.mxu0 %v152
    %217 = vmatpush.msra.mxu0 %v148
    %218 = vmatpush.msra.mxu0 %v144
    %219 = vmatpush.msra.mxu0 %v140
    %220 = vmatpush.msra.mxu0 %v136
    %221 = vmatpush.msra.mxu0 %v132
    %222 = vmatpush.msra.mxu0 %v128
    %223 = vmatpush.msra.mxu0 %v124
    %224 = vmatpush.msra.mxu0 %v120
    %225 = vmatpush.msra.mxu0 %v116
    %226 = vmatpush.msra.mxu0 %v112
    %227 = vmatpush.msra.mxu0 %v108
    %228 = vmatmul.f32.gmra.mxu0 %v84
    %v229 = vpop.f32.mrf.mxu0
    %v230 = vadd.f32 0.0, %v229
    %231 = vmatmul.f32.gmra.mxu0 %v87
    %v232 = vpop.f32.mrf.mxu0
    %v233 = vadd.f32 0.0, %v232
    %234 = vmatmul.f32.gmra.mxu0 %v90
    %v235 = vpop.f32.mrf.mxu0
    %v236 = vadd.f32 0.0, %v235
    %237 = vmatmul.f32.gmra.mxu0 %v93
    %v238 = vpop.f32.mrf.mxu0
    %v239 = vadd.f32 0.0, %v238
    %240 = vmatmul.f32.gmra.mxu0 %v96
    %v241 = vpop.f32.mrf.mxu0
    %v242 = vadd.f32 0.0, %v241
    %243 = vmatmul.f32.gmra.mxu0 %v99
    %v244 = vpop.f32.mrf.mxu0
    %v245 = vadd.f32 0.0, %v244
    %246 = vmatmul.f32.gmra.mxu0 %v102
    %v247 = vpop.f32.mrf.mxu0
    %v248 = vadd.f32 0.0, %v247
    %249 = vmatmul.f32.gmra.mxu0 %v105
    %v250 = vpop.f32.mrf.mxu0
    %v251 = vadd.f32 0.0, %v250
    %252 = vdwg.mxu0
    %253 = vmatpush.msra.mxu0 %v169
    %254 = vmatpush.msra.mxu0 %v165
    %255 = vmatpush.msra.mxu0 %v161
    %256 = vmatpush.msra.mxu0 %v157
    %257 = vmatpush.msra.mxu0 %v153
    %258 = vmatpush.msra.mxu0 %v149
    %259 = vmatpush.msra.mxu0 %v145
    %260 = vmatpush.msra.mxu0 %v141
    %261 = vmatpush.msra.mxu0 %v137
    %262 = vmatpush.msra.mxu0 %v133
    %263 = vmatpush.msra.mxu0 %v129
    %264 = vmatpush.msra.mxu0 %v125
    %265 = vmatpush.msra.mxu0 %v121
    %266 = vmatpush.msra.mxu0 %v117
    %267 = vmatpush.msra.mxu0 %v113
    %268 = vmatpush.msra.mxu0 %v109
    %269 = vmatmul.f32.gmra.mxu0 %v84
    %v270 = vpop.f32.mrf.mxu0
    %v271 = vadd.f32 0.0, %v270
    %272 = vmatmul.f32.gmra.mxu0 %v87
    %v273 = vpop.f32.mrf.mxu0
    %v274 = vadd.f32 0.0, %v273
    %275 = vmatmul.f32.gmra.mxu0 %v90
    %v276 = vpop.f32.mrf.mxu0
    %v277 = vadd.f32 0.0, %v276
    %278 = vmatmul.f32.gmra.mxu0 %v93
    %v279 = vpop.f32.mrf.mxu0
    %v280 = vadd.f32 0.0, %v279
    %281 = vmatmul.f32.gmra.mxu0 %v96
    %v282 = vpop.f32.mrf.mxu0
    %v283 = vadd.f32 0.0, %v282
    %284 = vmatmul.f32.gmra.mxu0 %v99
    %v285 = vpop.f32.mrf.mxu0
    %v286 = vadd.f32 0.0, %v285
    %287 = vmatmul.f32.gmra.mxu0 %v102
    %v288 = vpop.f32.mrf.mxu0
    %v289 = vadd.f32 0.0, %v288
    %290 = vmatmul.f32.gmra.mxu0 %v105
    %v291 = vpop.f32.mrf.mxu0
    %v292 = vadd.f32 0.0, %v291
    %293 = vdwg.mxu0
    %294 = vmatpush.msra.mxu0 %v170
    %295 = vmatpush.msra.mxu0 %v166
    %296 = vmatpush.msra.mxu0 %v162
    %297 = vmatpush.msra.mxu0 %v158
    %298 = vmatpush.msra.mxu0 %v154
    %299 = vmatpush.msra.mxu0 %v150
    %300 = vmatpush.msra.mxu0 %v146
    %301 = vmatpush.msra.mxu0 %v142
    %302 = vmatpush.msra.mxu0 %v138
    %303 = vmatpush.msra.mxu0 %v134
    %304 = vmatpush.msra.mxu0 %v130
    %305 = vmatpush.msra.mxu0 %v126
    %306 = vmatpush.msra.mxu0 %v122
    %307 = vmatpush.msra.mxu0 %v118
    %308 = vmatpush.msra.mxu0 %v114
    %309 = vmatpush.msra.mxu0 %v110
    %310 = vmatmul.f32.gmra.mxu0 %v84
    %v311 = vpop.f32.mrf.mxu0
    %v312 = vadd.f32 0.0, %v311
    %313 = vmatmul.f32.gmra.mxu0 %v87
    %v314 = vpop.f32.mrf.mxu0
    %v315 = vadd.f32 0.0, %v314
    %316 = vmatmul.f32.gmra.mxu0 %v90
    %v317 = vpop.f32.mrf.mxu0
    %v318 = vadd.f32 0.0, %v317
    %319 = vmatmul.f32.gmra.mxu0 %v93
    %v320 = vpop.f32.mrf.mxu0
    %v321 = vadd.f32 0.0, %v320
    %322 = vmatmul.f32.gmra.mxu0 %v96
    %v323 = vpop.f32.mrf.mxu0
    %v324 = vadd.f32 0.0, %v323
    %325 = vmatmul.f32.gmra.mxu0 %v99
    %v326 = vpop.f32.mrf.mxu0
    %v327 = vadd.f32 0.0, %v326
    %328 = vmatmul.f32.gmra.mxu0 %v102
    %v329 = vpop.f32.mrf.mxu0
    %v330 = vadd.f32 0.0, %v329
    %331 = vmatmul.f32.gmra.mxu0 %v105
    %v332 = vpop.f32.mrf.mxu0
    %v333 = vadd.f32 0.0, %v332
    %334 = vdwg.mxu0
    %335 = vst [vmem:[#allocation5] sm:$0xff] %v189
    %336 = vst [vmem:[#allocation5 + $0x8] sm:$0xff] %v230
    %337 = vst [vmem:[#allocation5 + $0x10] sm:$0xff] %v271
    %338 = vst [vmem:[#allocation5 + $0x18] sm:$0xff] %v312
    %339 = vst [vmem:[#allocation5 + $0x20] sm:$0xff] %v192
    %340 = vst [vmem:[#allocation5 + $0x28] sm:$0xff] %v233
    %341 = vst [vmem:[#allocation5 + $0x30] sm:$0xff] %v274
    %342 = vst [vmem:[#allocation5 + $0x38] sm:$0xff] %v315
    %343 = vst [vmem:[#allocation5 + $0x40] sm:$0xff] %v195
    %344 = vst [vmem:[#allocation5 + $0x48] sm:$0xff] %v236
    %345 = vst [vmem:[#allocation5 + $0x50] sm:$0xff] %v277
    %346 = vst [vmem:[#allocation5 + $0x58] sm:$0xff] %v318
    %347 = vst [vmem:[#allocation5 + $0x60] sm:$0xff] %v198
    %348 = vst [vmem:[#allocation5 + $0x68] sm:$0xff] %v239
    %349 = vst [vmem:[#allocation5 + $0x70] sm:$0xff] %v280
    %350 = vst [vmem:[#allocation5 + $0x78] sm:$0xff] %v321
    %351 = vst [vmem:[#allocation5 + $0x80] sm:$0xff] %v201
    %352 = vst [vmem:[#allocation5 + $0x88] sm:$0xff] %v242
    %353 = vst [vmem:[#allocation5 + $0x90] sm:$0xff] %v283
    %354 = vst [vmem:[#allocation5 + $0x98] sm:$0xff] %v324
    %355 = vst [vmem:[#allocation5 + $0xa0] sm:$0xff] %v204
    %356 = vst [vmem:[#allocation5 + $0xa8] sm:$0xff] %v245
    %357 = vst [vmem:[#allocation5 + $0xb0] sm:$0xff] %v286
    %358 = vst [vmem:[#allocation5 + $0xb8] sm:$0xff] %v327
    %359 = vst [vmem:[#allocation5 + $0xc0] sm:$0xff] %v207
    %360 = vst [vmem:[#allocation5 + $0xc8] sm:$0xff] %v248
    %361 = vst [vmem:[#allocation5 + $0xd0] sm:$0xff] %v289
    %362 = vst [vmem:[#allocation5 + $0xd8] sm:$0xff] %v330
    %363 = vst [vmem:[#allocation5 + $0xe0] sm:$0xff] %v210
    %364 = vst [vmem:[#allocation5 + $0xe8] sm:$0xff] %v251
    %365 = vst [vmem:[#allocation5 + $0xf0] sm:$0xff] %v292
    %366 = vst [vmem:[#allocation5 + $0xf8] sm:$0xff] %v333
    // Predicated region
    $region18: #{tpu_custom_call.1} parent=1 // pred_check
      _
    $region19: #{tpu_custom_call.1} parent=1 // pred_check_branch
      %368 = sbr.rel (0) target = $region21
    $region20: #{tpu_custom_call.1} parent=1 // pred_region
      %370 = vsyncadd [#allocation4], 0
      %s371 = sshll.u32 [#allocation5], 4
      %s372 = int_to_ptr.vmem [resolvable:$true] %s371
      %s373 = sshll.u32 %s3, 4
      %s374 = int_to_ptr.hbm [resolvable:$true] %s373
      %379 = dma.vmem_to_hbm [thread:$0]  %s372, 4096, %s374, [#allocation4], 512, 512, 32
    $region21: #{tpu_custom_call.1} parent=1 // pred_fallthru
      _
    // Predicated region
    $region22: #{tpu_custom_call.1} parent=1 // pred_check
      _
    $region23: #{tpu_custom_call.1} parent=1 // pred_check_branch
      %381 = sbr.rel (0) target = $region25
    $region24: #{tpu_custom_call.1} parent=1 // pred_region
      %383 = dma.done [#allocation4], 4096
    $region25: #{tpu_custom_call.1} parent=1 // pred_fallthru
      _
    %384 = vsyncpa [#allocation3], 1
    %385 = vsyncpa [#allocation4], 1

</llo_original>
